<compile_context>
chip_gen: v7x
topology: tpu7x:2x2x1
jax: 0.10.0
libtpu: 0.0.40
codegen_flags: <defaults>
</compile_context>

<pallas_src>
import math

import jax
import jax.numpy as jnp
from jax import lax
from jax.experimental import pallas as pl
from jax.experimental.pallas import tpu as pltpu


# ---------------------------------------------------------------------------
# Helpers
# ---------------------------------------------------------------------------
def _round_up(x, m):
    return ((x + m - 1) // m) * m


def _pick_tile(dim, target, align):
    """Bounded block size + padded extent for `dim`.

    Prefers a multiple of `align` <= target that divides `dim` exactly (no
    padding); otherwise returns a bounded tile together with the padded
    extent.  Never falls back to an unbounded full-extent block."""
    if dim <= target:
        if dim % align == 0:
            return dim, dim
        t = _round_up(dim, align)
        return t, t
    t = (target // align) * align
    while t >= align:
        if dim % t == 0:
            return t, dim
        t -= align
    t = (target // align) * align
    return t, _round_up(dim, t)


def _divisor_tile(dim, target, align):
    """Like _pick_tile but never pads (for arrays that cannot be padded,
    e.g. the fused QKV activation whose rows double as keys/values).  Callers
    keep the full-extent fallback bounded by only taking this path for
    aligned sequence lengths."""
    if dim <= target:
        return dim
    t = (target // align) * align
    while t >= align:
        if dim % t == 0:
            return t
        t -= align
    return dim


def _vmem_limit_bytes():
    # Derive the scoped-VMEM cap from the actual chip (v5e/v6e: 128 MiB,
    # v7x: 64 MiB) with ~25% headroom for compiler scratch.
    cap = 64 * 1024 * 1024
    try:
        info = pltpu.get_tpu_info()
        cap = int(getattr(info, "vmem_capacity_bytes", cap) or cap)
    except Exception:
        pass
    return min((cap * 3) // 4, 100 * 1024 * 1024)


_VMEM_LIMIT = _vmem_limit_bytes()


# ---------------------------------------------------------------------------
# Tiled linear (matmul + bias)
# ---------------------------------------------------------------------------
def linear_kernel(x_ref, w_ref, b_ref, o_ref, acc_ref):
    kk = pl.program_id(2)

    @pl.when(kk == 0)
    def _():
        acc_ref[...] = jnp.zeros_like(acc_ref)

    acc_ref[...] += jnp.dot(
        x_ref[...], w_ref[...], preferred_element_type=jnp.float32
    )

    @pl.when(kk == pl.num_programs(2) - 1)
    def _():
        o_ref[...] = (acc_ref[...] + b_ref[...]).astype(o_ref.dtype)


def pallas_linear(x2d, w, b, *, mxu_dtype=jnp.bfloat16, out_dtype=None,
                  tm=512, tn=256, tk=512):
    """(M, K) @ (K, N) + (N,) -> (M, N) with f32 accumulation.

    Operands are cast to `mxu_dtype` (bf16 by default: the MXU is bf16-native
    on v5e/v6e/v7x and it halves HBM/DMA traffic); the accumulator and bias
    add stay f32.  Dims are zero-padded to bounded tile multiples (exact
    result in the valid region, sliced off on return)."""
    m, kd = x2d.shape
    n = w.shape[1]
    if out_dtype is None:
        out_dtype = x2d.dtype
    tm, m_pad = _pick_tile(m, tm, 16)     # 16-row alignment is bf16-safe
    tn, n_pad = _pick_tile(n, tn, 128)
    tk, k_pad = _pick_tile(kd, tk, 128)

    x2d = x2d.astype(mxu_dtype)
    w = w.astype(mxu_dtype)
    if (m_pad, k_pad) != (m, kd):
        x2d = jnp.pad(x2d, ((0, m_pad - m), (0, k_pad - kd)))
    if (k_pad, n_pad) != (kd, n):
        w = jnp.pad(w, ((0, k_pad - kd), (0, n_pad - n)))
    b2d = b.astype(jnp.float32).reshape(1, n)
    if n_pad != n:
        b2d = jnp.pad(b2d, ((0, 0), (0, n_pad - n)))

    out = pl.pallas_call(
        linear_kernel,
        out_shape=jax.ShapeDtypeStruct((m_pad, n_pad), out_dtype),
        grid_spec=pltpu.PrefetchScalarGridSpec(
            num_scalar_prefetch=0,
            grid=(m_pad // tm, n_pad // tn, k_pad // tk),
            in_specs=[
                pl.BlockSpec((tm, tk), lambda i, j, kk: (i, kk)),
                pl.BlockSpec((tk, tn), lambda i, j, kk: (kk, j)),
                pl.BlockSpec((1, tn), lambda i, j, kk: (0, j)),
            ],
            out_specs=pl.BlockSpec((tm, tn), lambda i, j, kk: (i, j)),
            scratch_shapes=[pltpu.VMEM((tm, tn), jnp.float32)],
        ),
        compiler_params=pltpu.CompilerParams(
            dimension_semantics=("parallel", "parallel", "arbitrary"),
            vmem_limit_bytes=_VMEM_LIMIT,
        ),
    )(x2d, w, b2d)

    if (m_pad, n_pad) != (m, n):
        out = out[:m, :n]
    return out


# ---------------------------------------------------------------------------
# Attention
# ---------------------------------------------------------------------------
def make_attn_kernel(heads_in_block, d_k, return_scores):
    def attn_kernel(q_ref, k_ref, v_ref, o_ref, *score_refs):
        # 1/sqrt(d_k) is pre-folded into the Q projection weights.
        for hh in range(heads_in_block):
            lo, hi = hh * d_k, (hh + 1) * d_k
            qh = q_ref[0, :, lo:hi]          # (tq,   d_k) compute dtype
            kh = k_ref[0, :, lo:hi]          # (S_kv, d_k)
            vh = v_ref[0, :, lo:hi]          # (S_kv, d_k)
            # q @ k^T via transposed-RHS contraction (no XLU transpose);
            # bf16 operands, f32 accumulation on the MXU.
            s = lax.dot_general(
                qh, kh,
                dimension_numbers=(((1,), (1,)), ((), ())),
                preferred_element_type=jnp.float32,
            )                                 # (tq, S_kv) f32
            m = jnp.max(s, axis=-1, keepdims=True)
            p = jnp.exp(s - m)                # softmax math stays f32 (v5e)
            denom = jnp.sum(p, axis=-1, keepdims=True)
            # EUP reciprocal estimate + one Newton step: ~f32-accurate, no
            # VALU divide sequence.
            r = pl.reciprocal(denom, approx=True)
            r = r * (2.0 - denom * r)
            if return_scores:
                # Score output requires the normalized probabilities.
                p = p * r
                score_refs[0][0, hh] = p.astype(score_refs[0].dtype)
                o = jnp.dot(p.astype(vh.dtype), vh,
                            preferred_element_type=jnp.float32)
            else:
                # Normalize after PV: scales a (tq, d_k) result instead of
                # the whole (tq, S_kv) probability tile.
                o = jnp.dot(p.astype(vh.dtype), vh,
                            preferred_element_type=jnp.float32) * r
            o_ref[0, :, lo:hi] = o.astype(o_ref.dtype)

    return attn_kernel


def pallas_attention(q_arr, k_arr, v_arr, *, heads, d_model,
                     q_off=0, k_off=0, v_off=0, can_pad=True,
                     return_scores=False, scores_dtype=jnp.float32,
                     q_tile=128):
    """Scaled-dot-product attention over (B, S, d_model)-layout activations.

    q_arr/k_arr/v_arr may all be the *same* fused (B, S, 3*d_model) array, in
    which case q_off/k_off/v_off (in d_model units) select the slice to read
    zero-copy via the BlockSpec index_map.  Heads go on a grid axis when d_k
    is lane-aligned (d_k % 128 == 0): per-step K/V blocks shrink by `heads`x
    and live ranges are bounded; otherwise a short static head loop with lane
    slices runs inside the kernel."""
    B, S_q = q_arr.shape[0], q_arr.shape[1]
    S_kv = k_arr.shape[1]
    d_k = d_model // heads

    if d_k % 128 == 0:
        heads_in_block, bw = 1, d_k           # per-head blocks on the grid
    else:
        # TODO(synk): d_k < 128 head slices are lane-misaligned (masked
        # stores); pad heads to 128 lanes if this becomes the bottleneck.
        heads_in_block, bw = heads, d_model   # whole-d_model block, head loop
    h_grid = heads // heads_in_block
    dm_blocks = d_model // bw                 # d_model measured in bw blocks

    if can_pad:
        tq, S_q_pad = _pick_tile(S_q, q_tile, 16)
        if S_q_pad != S_q:
            q_arr = jnp.pad(q_arr, ((0, 0), (0, S_q_pad - S_q), (0, 0)))
    else:
        tq = _divisor_tile(S_q, q_tile, 16)
        S_q_pad = S_q
    n_q = S_q_pad // tq

    kernel = make_attn_kernel(heads_in_block, d_k, return_scores)

    # K/V index_maps ignore the (innermost) q-tile axis, so they stay
    # VMEM-resident across all q tiles of a (batch, head) pair.
    # TODO(synk): flash-style KV tiling (online softmax) for very long S_kv;
    # bf16 storage + the head-grid axis already cut the K/V footprint
    # 2*heads-fold vs the previous full-width f32 blocks.
    q_spec = pl.BlockSpec((1, tq, bw),
                          lambda b, h, qi: (b, qi, q_off * dm_blocks + h))
    k_spec = pl.BlockSpec((1, S_kv, bw),
                          lambda b, h, qi: (b, 0, k_off * dm_blocks + h))
    v_spec = pl.BlockSpec((1, S_kv, bw),
                          lambda b, h, qi: (b, 0, v_off * dm_blocks + h))
    o_spec = pl.BlockSpec((1, tq, bw), lambda b, h, qi: (b, qi, h))
    o_shape = jax.ShapeDtypeStruct((B, S_q_pad, d_model), q_arr.dtype)

    if return_scores:
        out_shape = (
            o_shape,
            jax.ShapeDtypeStruct((B, heads, S_q_pad, S_kv), scores_dtype),
        )
        out_specs = [
            o_spec,
            pl.BlockSpec((1, heads_in_block, tq, S_kv),
                         lambda b, h, qi: (b, h, qi, 0)),
        ]
    else:
        out_shape = o_shape
        out_specs = o_spec

    res = pl.pallas_call(
        kernel,
        out_shape=out_shape,
        grid_spec=pltpu.PrefetchScalarGridSpec(
            num_scalar_prefetch=0,
            grid=(B, h_grid, n_q),
            in_specs=[q_spec, k_spec, v_spec],
            out_specs=out_specs,
        ),
        compiler_params=pltpu.CompilerParams(
            dimension_semantics=("parallel", "parallel", "parallel"),
            vmem_limit_bytes=_VMEM_LIMIT,
        ),
    )(q_arr, k_arr, v_arr)

    if return_scores:
        out, scores = res
    else:
        out, scores = res, None
    if S_q_pad != S_q:
        out = out[:, :S_q]
        if scores is not None:
            scores = scores[:, :, :S_q]
    return out, scores


# ---------------------------------------------------------------------------
# Full module forward
# ---------------------------------------------------------------------------
def multi_head_attention_forward(params, q, k, v, heads, *,
                                 return_scores=False,
                                 compute_dtype=jnp.bfloat16):
    """q: (B, S_q, d_model); k, v: (B, S_kv, d_model).

    Eval-mode forward of the PyTorch MultiHeadAttention module.  MXU operands
    run in `compute_dtype` (bf16 default, f32 accumulation); pass
    jnp.float32 for exact mode.  Returns (output, scores-or-None)."""
    B, S_q, d_model = q.shape
    S_kv = k.shape[1]
    d_k = d_model // heads
    out_dtype = q.dtype

    # Fold the 1/sqrt(d_k) softmax scale into the Q projection (zero kernel
    # cost instead of scaling every (tq, S_kv) score tile).
    q_w = params["q_w"] * (1.0 / math.sqrt(d_k))
    q_b = params["q_b"] * (1.0 / math.sqrt(d_k))

    if q is k and k is v:
        # Self-attention: fuse Q/K/V projections into one (d_model, 3*d_model)
        # matmul (one pass over x, wider N for the MXU).
        w_qkv = jnp.concatenate([q_w, params["k_w"], params["v_w"]], axis=1)
        b_qkv = jnp.concatenate([q_b, params["k_b"], params["v_b"]])
        qkv = pallas_linear(q.reshape(B * S_q, d_model), w_qkv, b_qkv,
                            mxu_dtype=compute_dtype, out_dtype=compute_dtype)
        qkv = qkv.reshape(B, S_q, 3 * d_model)
        if d_model % 128 == 0 and (S_q % 16 == 0 or S_q <= 128):
            # Zero-copy feed of the fused activation via index_map offsets.
            attn_out, scores = pallas_attention(
                qkv, qkv, qkv, heads=heads, d_model=d_model,
                q_off=0, k_off=1, v_off=2, can_pad=False,
                return_scores=return_scores, scores_dtype=out_dtype)
        else:
            qp = qkv[..., 0 * d_model:1 * d_model]
            kp = qkv[..., 1 * d_model:2 * d_model]
            vp = qkv[..., 2 * d_model:3 * d_model]
            attn_out, scores = pallas_attention(
                qp, kp, vp, heads=heads, d_model=d_model, can_pad=True,
                return_scores=return_scores, scores_dtype=out_dtype)
    else:
        qp = pallas_linear(q.reshape(B * S_q, d_model), q_w, q_b,
                           mxu_dtype=compute_dtype, out_dtype=compute_dtype
                           ).reshape(B, S_q, d_model)
        kp = pallas_linear(k.reshape(B * S_kv, d_model),
                           params["k_w"], params["k_b"],
                           mxu_dtype=compute_dtype, out_dtype=compute_dtype
                           ).reshape(B, S_kv, d_model)
        vp = pallas_linear(v.reshape(B * S_kv, d_model),
                           params["v_w"], params["v_b"],
                           mxu_dtype=compute_dtype, out_dtype=compute_dtype
                           ).reshape(B, S_kv, d_model)
        attn_out, scores = pallas_attention(
            qp, kp, vp, heads=heads, d_model=d_model, can_pad=True,
            return_scores=return_scores, scores_dtype=out_dtype)

    out = pallas_linear(attn_out.reshape(B * S_q, d_model),
                        params["out_w"], params["out_b"],
                        mxu_dtype=compute_dtype, out_dtype=out_dtype)
    return out.reshape(B, S_q, d_model), scores


def init_params(key, d_model):
    """Deterministic parameter init.  Weights stored as (d_in, d_out)
    (already transposed relative to torch.nn.Linear's (out, in))."""
    params = {}
    bound = 1.0 / math.sqrt(d_model)
    for i, name in enumerate(["q", "k", "v", "out"]):
        kw, kb = jax.random.split(jax.random.fold_in(key, i))
        params[name + "_w"] = jax.random.uniform(
            kw, (d_model, d_model), jnp.float32, -bound, bound)
        params[name + "_b"] = jax.random.uniform(
            kb, (d_model,), jnp.float32, -bound, bound)
    return params


# ---------------------------------------------------------------------------
# Pure-JAX reference (sanity check)
# ---------------------------------------------------------------------------
def reference_forward(params, q, k, v, heads):
    B, S_q, d_model = q.shape
    d_k = d_model // heads

    def proj(x, name):
        y = x @ params[name + "_w"] + params[name + "_b"]
        return y.reshape(B, x.shape[1], heads, d_k).transpose(0, 2, 1, 3)

    qh, kh, vh = proj(q, "q"), proj(k, "k"), proj(v, "v")
    scores = jnp.einsum("bhqd,bhkd->bhqk", qh, kh) / math.sqrt(d_k)
    scores = jax.nn.softmax(scores, axis=-1)
    out = jnp.einsum("bhqk,bhkd->bhqd", scores, vh)
    concat = out.transpose(0, 2, 1, 3).reshape(B, S_q, d_model)
    return concat @ params["out_w"] + params["out_b"], scores


# ---------------------------------------------------------------------------
if __name__ == "__main__":
    key = jax.random.PRNGKey(0)

    # --- Config A: heads=4, d_model=128 (d_k=32 -> in-kernel head loop) ----
    B, S, d_model, heads = 2, 8, 128, 4
    kparam, kq, kk_, kv_ = jax.random.split(key, 4)
    params = init_params(kparam, d_model)
    x = jax.random.normal(kq, (B, S, d_model), jnp.float32)
    k_in = jax.random.normal(kk_, (B, 12, d_model), jnp.float32)  # S_kv != S_q
    v_in = jax.random.normal(kv_, (B, 12, d_model), jnp.float32)

    ref_out1, ref_scores1 = reference_forward(params, x, x, x, heads)
    ref_out2, _ = reference_forward(params, x, k_in, v_in, heads)

    # 1) Self-attention, f32 MXU mode (tight check), fused-QKV path, scores.
    out1, scores1 = multi_head_attention_forward(
        params, x, x, x, heads, return_scores=True,
        compute_dtype=jnp.float32)
    out1 = jax.block_until_ready(out1)
    assert out1.shape == (B, S, d_model)
    assert scores1.shape == (B, heads, S, S)
    assert jnp.allclose(out1, ref_out1, atol=1e-3, rtol=1e-3)
    assert jnp.allclose(scores1, ref_scores1, atol=1e-3, rtol=1e-3)

    # 2) Cross-attention (distinct q/k/v, S_kv != S_q), f32, no scores.
    out2, scores2 = multi_head_attention_forward(
        params, x, k_in, v_in, heads, return_scores=False,
        compute_dtype=jnp.float32)
    out2 = jax.block_until_ready(out2)
    assert scores2 is None
    assert out2.shape == (B, S, d_model)
    assert jnp.allclose(out2, ref_out2, atol=1e-3, rtol=1e-3)

    # 3) Self-attention, default bf16 MXU mode (fast path), scores returned.
    out3, scores3 = multi_head_attention_forward(
        params, x, x, x, heads, return_scores=True)
    out3 = jax.block_until_ready(out3)
    assert jnp.allclose(out3, ref_out1, atol=5e-2, rtol=5e-2)
    assert jnp.allclose(scores3, ref_scores1, atol=2e-2, rtol=2e-2)

    # --- Config B: heads=2, d_model=256 (d_k=128 -> head-grid path) --------
    B2, S2, d_model2, heads2 = 2, 16, 256, 2
    kparam2, kx2 = jax.random.split(jax.random.fold_in(key, 7))
    params2 = init_params(kparam2, d_model2)
    x2 = jax.random.normal(kx2, (B2, S2, d_model2), jnp.float32)
    ref_out4, ref_scores4 = reference_forward(params2, x2, x2, x2, heads2)
    out4, scores4 = multi_head_attention_forward(
        params2, x2, x2, x2, heads2, return_scores=True)
    out4 = jax.block_until_ready(out4)
    assert out4.shape == (B2, S2, d_model2)
    assert scores4.shape == (B2, heads2, S2, S2)
    assert jnp.allclose(out4, ref_out4, atol=5e-2, rtol=5e-2)
    assert jnp.allclose(scores4, ref_scores4, atol=2e-2, rtol=2e-2)

    print("KERNEL_OK")
</pallas_src>

<mosaic_0001>
module attributes {stable_mosaic.version = 11 : i64} {
  func.func @linear_kernel(%arg0: i32, %arg1: i32, %arg2: i32, %arg3: memref<16x128xf32, #tpu.memory_space<vmem>>, %arg4: memref<128x128xf32, #tpu.memory_space<vmem>>, %arg5: memref<1x128xf32, #tpu.memory_space<vmem>>, %arg6: memref<16x128xf32, #tpu.memory_space<vmem>>, %arg7: memref<16x128xf32, #tpu.memory_space<vmem>>) attributes {dimension_semantics = [#tpu.dimension_semantics<parallel>, #tpu.dimension_semantics<parallel>, #tpu.dimension_semantics<arbitrary>], iteration_bounds = array<i64: 1, 3, 1>, scalar_prefetch = 0 : i64, scratch_operands = 1 : i64, tpu.core_type = #tpu.core_type<tc>, window_params = [{transform_indices = @transform_0, window_bounds = array<i64: 16, 128>}, {transform_indices = @transform_1, window_bounds = array<i64: 128, 128>}, {transform_indices = @transform_2, window_bounds = array<i64: 1, 128>}, {transform_indices = @transform_3, window_bounds = array<i64: 16, 128>}]} {
    %c0_i32 = arith.constant 0 : i32
    %0 = arith.cmpi eq, %arg2, %c0_i32 : i32
    %1 = arith.extui %0 : i1 to i32
    %c0_i32_0 = arith.constant 0 : i32
    %2 = arith.cmpi ne, %1, %c0_i32_0 : i32
    scf.if %2 {
      %cst_10 = arith.constant 0.000000e+00 : f32
      %12 = vector.broadcast %cst_10 : f32 to vector<16x128xf32>
      %c0_11 = arith.constant 0 : index
      %c0_12 = arith.constant 0 : index
      %13 = vector.load %arg7[%c0_11, %c0_12] : memref<16x128xf32, #tpu.memory_space<vmem>>, vector<16x128xf32>
      tpu.vector_store %arg7[%c0_11, %c0_12], %12 {strides = array<i32>} : memref<16x128xf32, #tpu.memory_space<vmem>>, vector<16x128xf32>,
    } else {
    }
    %c0 = arith.constant 0 : index
    %c0_1 = arith.constant 0 : index
    %3 = vector.load %arg7[%c0, %c0_1] : memref<16x128xf32, #tpu.memory_space<vmem>>, vector<16x128xf32>
    %c0_2 = arith.constant 0 : index
    %c0_3 = arith.constant 0 : index
    %4 = vector.load %arg3[%c0_2, %c0_3] : memref<16x128xf32, #tpu.memory_space<vmem>>, vector<16x128xf32>
    %c0_4 = arith.constant 0 : index
    %c0_5 = arith.constant 0 : index
    %5 = vector.load %arg4[%c0_4, %c0_5] : memref<128x128xf32, #tpu.memory_space<vmem>>, vector<128x128xf32>
    %cst = arith.constant dense<0.000000e+00> : vector<16x128xf32>
    %6 = tpu.matmul %4, %5, %cst {dimension_numbers = #tpu.dot_dimension_numbers<[1], [0], [0], [1], [0, 0, 1, 1], [], []>} : vector<16x128xf32>, vector<128x128xf32>, vector<16x128xf32> -> vector<16x128xf32>
    %7 = arith.addf %3, %6 : vector<16x128xf32>
    %c0_6 = arith.constant 0 : index
    %c0_7 = arith.constant 0 : index
    %8 = vector.load %arg7[%c0_6, %c0_7] : memref<16x128xf32, #tpu.memory_space<vmem>>, vector<16x128xf32>
    tpu.vector_store %arg7[%c0_6, %c0_7], %7 {strides = array<i32>} : memref<16x128xf32, #tpu.memory_space<vmem>>, vector<16x128xf32>,
    %c0_i32_8 = arith.constant 0 : i32
    %9 = arith.cmpi eq, %arg2, %c0_i32_8 : i32
    %10 = arith.extui %9 : i1 to i32
    %c0_i32_9 = arith.constant 0 : i32
    %11 = arith.cmpi ne, %10, %c0_i32_9 : i32
    scf.if %11 {
      %c0_10 = arith.constant 0 : index
      %c0_11 = arith.constant 0 : index
      %12 = vector.load %arg7[%c0_10, %c0_11] : memref<16x128xf32, #tpu.memory_space<vmem>>, vector<16x128xf32>
      %c0_12 = arith.constant 0 : index
      %c0_13 = arith.constant 0 : index
      %13 = vector.load %arg5[%c0_12, %c0_13] : memref<1x128xf32, #tpu.memory_space<vmem>>, vector<1x128xf32>
      %14 = vector.broadcast %13 : vector<1x128xf32> to vector<16x128xf32>
      %15 = arith.addf %12, %14 : vector<16x128xf32>
      %c0_14 = arith.constant 0 : index
      %c0_15 = arith.constant 0 : index
      %16 = vector.load %arg6[%c0_14, %c0_15] : memref<16x128xf32, #tpu.memory_space<vmem>>, vector<16x128xf32>
      tpu.vector_store %arg6[%c0_14, %c0_15], %15 {strides = array<i32>} : memref<16x128xf32, #tpu.memory_space<vmem>>, vector<16x128xf32>,
    } else {
    }
    return
  }
  func.func @transform_0(%arg0: i32, %arg1: i32, %arg2: i32) -> (i32, i32) {
    %c0_i32 = arith.constant 0 : i32
    return %arg0, %arg2 : i32, i32
  }
  func.func @transform_1(%arg0: i32, %arg1: i32, %arg2: i32) -> (i32, i32) {
    %c0_i32 = arith.constant 0 : i32
    return %arg2, %arg1 : i32, i32
  }
  func.func @transform_2(%arg0: i32, %arg1: i32, %arg2: i32) -> (i32, i32) {
    %c0_i32 = arith.constant 0 : i32
    %c0_i32_0 = arith.constant 0 : i32
    return %c0_i32, %arg1 : i32, i32
  }
  func.func @transform_3(%arg0: i32, %arg1: i32, %arg2: i32) -> (i32, i32) {
    %c0_i32 = arith.constant 0 : i32
    return %arg0, %arg1 : i32, i32
  }
}

</mosaic_0001>

<llo_original>
// kernel: tpu_custom_call.1
$region0: #{tpu_custom_call.1}
  #allocation0 [shape = 'u32[]', space=smem, size = 0x4, offset = 0x4, fixed_abs, tag = 'smem constant byte address 0x4 - core index']
  #allocation1 [shape = 'u32[144,128]{1,0:T(1,128)}', space=vmem, size = 0x12000, scoped, tag = 'internal scratch']
  #allocation2 [shape = 'f32[16,128]{1,0:T(8,128)}', space=vmem, size = 0x2000, scoped, tag = 'scratch operand']
  %s0 = inlined_call_operand.hbm [shape: f32[16,128], index: 0, kind: input, shape index: {}]
  %s1 = inlined_call_operand.hbm [shape: f32[128,384], index: 1, kind: input, shape index: {}]
  %s2 = inlined_call_operand.vmem [shape: f32[1,384], index: 2, kind: input, shape index: {}]
  %s3 = inlined_call_operand.hbm [shape: f32[16,384], index: 3, kind: output, shape index: {}]
  %s4 = sld [smem:[#allocation0]]
  $region61: #{tpu_custom_call.1} parent=0
    _
  %s6 = ssub.s32 1, %s4
  %s7 = scalar_select 0, %s6, %s4
  $region1: #{tpu_custom_call.1} parent=0
    #allocation3 [shape = 'u8[8192]{0}', space=vmem, size = 0x2000, scoped, tag = 'input window, operand 0, single buffered']
    #allocation4 [shape = 's32[2]{0}', space=sflag, size = 0x8, scoped, tag = 'scoped memory for tpu_custom_call.1']
    #allocation5 [shape = 's32[2]{0}', space=sflag, size = 0x8, scoped, tag = 'scoped memory for tpu_custom_call.1']
    #allocation6 [shape = 'u8[131072]{0}', space=vmem, size = 0x20000, scoped, tag = 'input window, operand 1']
    #allocation7 [shape = 's32[2]{0}', space=sflag, size = 0x8, scoped, tag = 'scoped memory for tpu_custom_call.1']
    #allocation8 [shape = 'u8[16384]{0}', space=vmem, size = 0x4000, scoped, tag = 'output window, operand 0']
    %8 = vsyncpa [#allocation4], 0
    %9 = vsyncpa [#allocation7], 0
    %s10 = scalar_lea.sflag [#allocation7], 1
    %11 = vsyncpa %s10, 0
    %12 = vsyncpa [#allocation5], 0
    %s13 = scalar_lea.sflag [#allocation5], 1
    %14 = vsyncpa %s13, 0
    loop: start=0, step=1, limit=5
    $region2: #{tpu_custom_call.1} parent=1 // loop_pre_header
      _
    $region3: #{tpu_custom_call.1} parent=1 // loop_header
      %s16 = sphi 0, %s20
      %p17 = scmp.ge.s32.totalorder %s16, 5
      %s23 = sphi 0, %s42
      %s24 = sphi 0, %s38
      %s25 = sphi 0, %s34
      %s26 = sphi 0, %s23
      %s27 = sphi 0, %s24
      %s28 = sphi 0, %s25
      %s29 = sphi 0, %s26
      %s30 = sphi 0, %s27
      %s31 = sphi 0, %s28
      %s47 = sphi 0, %s49
      %s50 = sphi 0, %s47
      %s51 = sphi 0, %s50
      %s67 = sphi 0, %s51
      %s75 = sphi 0, %s77
      %s78 = sphi 0, %s75
      %s79 = sphi 0, %s78
      %s95 = sphi 0, %s79
      %s101 = sphi 0, %s103
      %s104 = sphi 0, %s101
      %s105 = sphi 0, %s104
      %s121 = sphi 0, %s105
      %s129 = sphi 0, %s131
      %s132 = sphi 0, %s129
      %s133 = sphi 0, %s132
      %s149 = sphi 0, %s133
    $region4: #{tpu_custom_call.1} parent=1 // loop_header_branch
      %19 = sbr.rel (%p17) target = $region8
    $region5: #{tpu_custom_call.1} parent=1 // loop_body
      %s21 = ssub.s32 %s16, 1
      %s22 = ssub.s32 %s16, 2
      %s32 = sadd.s32 1, %s25
      %p33 = scmp.ge.s32.totalorder %s32, 1
      %s34 = scalar_select %p33, 0, %s32
      %s35 = sadd.s32 1, %s24
      %s36 = scalar_select %p33, %s35, %s24
      %p37 = scmp.ge.s32.totalorder %s36, 3
      %s38 = scalar_select %p37, 0, %s36
      %s39 = sadd.s32 1, %s23
      %s40 = scalar_select %p37, %s39, %s23
      %p41 = scmp.ge.s32.totalorder %s40, 1
      %s42 = scalar_select %p41, 0, %s40
      %s43 = ssub.s32 %s23, %s42
      %s44 = ssub.s32 %s25, %s34
      %s45 = sor.u32 %s43, %s44
      %p46 = scmp.eq.s32.totalorder %s45, 0
      %s48 = sadd.s32 %s47, 1
      %s49 = scalar_select %p46, %s47, %s48
      %p52 = pneg %p46
      %p53 = scmp.eq.s32.totalorder %s16, 2
      %p54 = por %p52, %p53
      %p55 = scmp.ne.s32.totalorder %s47, %s50
      %p56 = scmp.eq.s32.totalorder %s16, 0
      %p57 = por %p55, %p56
      %p58 = scmp.ne.s32.totalorder %s47, %s50
      %p59 = scmp.eq.s32.totalorder %s21, 2
      %p60 = por %p58, %p59
      %p61 = scmp.ne.s32.totalorder %s50, %s51
      %p62 = scmp.eq.s32.totalorder %s21, 0
      %p63 = por %p61, %p62
      %p64 = scmp.ne.s32.totalorder %s50, %s51
      %p65 = scmp.eq.s32.totalorder %s22, 2
      %p66 = por %p64, %p65
      %p68 = scmp.ne.s32.totalorder %s51, %s67
      %p69 = scmp.eq.s32.totalorder %s22, 0
      %p70 = por %p68, %p69
      %s71 = ssub.s32 %s25, %s34
      %s72 = ssub.s32 %s24, %s38
      %s73 = sor.u32 %s71, %s72
      %p74 = scmp.eq.s32.totalorder %s73, 0
      %s76 = sadd.s32 %s75, 1
      %s77 = scalar_select %p74, %s75, %s76
      %p80 = pneg %p74
      %p81 = scmp.eq.s32.totalorder %s16, 2
      %p82 = por %p80, %p81
      %p83 = scmp.ne.s32.totalorder %s75, %s78
      %p84 = scmp.eq.s32.totalorder %s16, 0
      %p85 = por %p83, %p84
      %p86 = scmp.ne.s32.totalorder %s75, %s78
      %p87 = scmp.eq.s32.totalorder %s21, 2
      %p88 = por %p86, %p87
      %p89 = scmp.ne.s32.totalorder %s78, %s79
      %p90 = scmp.eq.s32.totalorder %s21, 0
      %p91 = por %p89, %p90
      %p92 = scmp.ne.s32.totalorder %s78, %s79
      %p93 = scmp.eq.s32.totalorder %s22, 2
      %p94 = por %p92, %p93
      %p96 = scmp.ne.s32.totalorder %s79, %s95
      %p97 = scmp.eq.s32.totalorder %s22, 0
      %p98 = por %p96, %p97
      %s99 = ssub.s32 %s24, %s38
      %p100 = scmp.eq.s32.totalorder %s99, 0
      %s102 = sadd.s32 %s101, 1
      %s103 = scalar_select %p100, %s101, %s102
      %p106 = pneg %p100
      %p107 = scmp.eq.s32.totalorder %s16, 2
      %p108 = por %p106, %p107
      %p109 = scmp.ne.s32.totalorder %s101, %s104
      %p110 = scmp.eq.s32.totalorder %s16, 0
      %p111 = por %p109, %p110
      %p112 = scmp.ne.s32.totalorder %s101, %s104
      %p113 = scmp.eq.s32.totalorder %s21, 2
      %p114 = por %p112, %p113
      %p115 = scmp.ne.s32.totalorder %s104, %s105
      %p116 = scmp.eq.s32.totalorder %s21, 0
      %p117 = por %p115, %p116
      %p118 = scmp.ne.s32.totalorder %s104, %s105
      %p119 = scmp.eq.s32.totalorder %s22, 2
      %p120 = por %p118, %p119
      %p122 = scmp.ne.s32.totalorder %s105, %s121
      %p123 = scmp.eq.s32.totalorder %s22, 0
      %p124 = por %p122, %p123
      %s125 = ssub.s32 %s23, %s42
      %s126 = ssub.s32 %s24, %s38
      %s127 = sor.u32 %s125, %s126
      %p128 = scmp.eq.s32.totalorder %s127, 0
      %s130 = sadd.s32 %s129, 1
      %s131 = scalar_select %p128, %s129, %s130
      %p134 = pneg %p128
      %p135 = scmp.eq.s32.totalorder %s16, 2
      %p136 = por %p134, %p135
      %p137 = scmp.ne.s32.totalorder %s129, %s132
      %p138 = scmp.eq.s32.totalorder %s16, 0
      %p139 = por %p137, %p138
      %p140 = scmp.ne.s32.totalorder %s129, %s132
      %p141 = scmp.eq.s32.totalorder %s21, 2
      %p142 = por %p140, %p141
      %p143 = scmp.ne.s32.totalorder %s132, %s133
      %p144 = scmp.eq.s32.totalorder %s21, 0
      %p145 = por %p143, %p144
      %p146 = scmp.ne.s32.totalorder %s132, %s133
      %p147 = scmp.eq.s32.totalorder %s22, 2
      %p148 = por %p146, %p147
      %p150 = scmp.ne.s32.totalorder %s133, %s149
      %p151 = scmp.eq.s32.totalorder %s22, 0
      %p152 = por %p150, %p151
      %p153 = scmp.le.s32.totalorder 1, %s16
      %p154 = scmp.lt.s32.totalorder %s16, 4
      %p155 = pnand %p153, %p154
      %p156 = pneg %p155
      // Predicated region
      $region9: #{tpu_custom_call.1} parent=5 // pred_check
        _
      $region10: #{tpu_custom_call.1} parent=5 // pred_check_branch
        %158 = sbr.rel (%p155) target = $region12
      $region11: #{tpu_custom_call.1} parent=5 // pred_region
        %s159 = ssub.s32 %s16, 1
        // Predicated region
        $region13: #{tpu_custom_call.1} parent=11 // pred_check
          %p160 = pneg %p63
        $region14: #{tpu_custom_call.1} parent=11 // pred_check_branch
          %162 = sbr.rel (%p160) target = $region16
        $region15: #{tpu_custom_call.1} parent=11 // pred_region
          %s163 = smul.u32 2, %s26
          %s165 = ssub.s32 256, 256
          %166 = vsyncadd [#allocation4], %s165
          %s167 = sadd.s32 %s28, %s163
          %s168 = smul.addr %s167, 128
          %s169 = scalar_lea.hbm %s0, %s168
          %s170 = sshll.u32 [#allocation3], 4
          %s171 = int_to_ptr.vmem [resolvable:$true] %s170
          %176 = dma.hbm_to_vmem [thread:$0]  %s169, 256, %s171, [#allocation4], 128, 128, 8
        $region16: #{tpu_custom_call.1} parent=11 // pred_fallthru
          _
      $region12: #{tpu_custom_call.1} parent=5 // pred_fallthru
        _
      %p177 = scmp.lt.s32.totalorder %s16, 3
      // Predicated region
      $region17: #{tpu_custom_call.1} parent=5 // pred_check
        %p178 = pneg %p177
      $region18: #{tpu_custom_call.1} parent=5 // pred_check_branch
        %180 = sbr.rel (%p178) target = $region20
      $region19: #{tpu_custom_call.1} parent=5 // pred_region
        // Predicated region
        $region21: #{tpu_custom_call.1} parent=19 // pred_check
          %p181 = pneg %p85
        $region22: #{tpu_custom_call.1} parent=19 // pred_check_branch
          %183 = sbr.rel (%p181) target = $region24
        $region23: #{tpu_custom_call.1} parent=19 // pred_region
          %s184 = sand.u32 %s75, 1
          %s185 = scalar_lea.sflag [#allocation7], %s184
          %s186 = sand.u32 %s75, 1
          %s187 = smul.addr %s186, 128
          %s188 = scalar_lea.vmem [#allocation6], %s187
          %s189 = smul.u32 16, %s25
          %s191 = ssub.s32 2048, 2048
          %192 = vsyncadd %s185, %s191
          %s193 = smul.addr %s189, 3
          %s194 = sadd.s32 %s24, %s193
          %s195 = smul.addr %s194, 128
          %s196 = scalar_lea.hbm %s1, %s195
          %s197 = sshll.u32 %s188, 4
          %s198 = int_to_ptr.vmem [resolvable:$true] %s197
          %203 = dma.hbm_to_vmem [thread:$0]  %s196, 2048, %s198, %s185, 384, 128, 8
        $region24: #{tpu_custom_call.1} parent=19 // pred_fallthru
          _
        // Predicated region
        $region25: #{tpu_custom_call.1} parent=19 // pred_check
          %p204 = pneg %p111
        $region26: #{tpu_custom_call.1} parent=19 // pred_check_branch
          %206 = sbr.rel (%p204) target = $region28
        $region27: #{tpu_custom_call.1} parent=19 // pred_region
          %p207 = scmp.lt.s32.totalorder %s24, 2
          %s208 = scalar_select %p207, %s24, 2
          %s209 = scalar_lea.vmem %s2, %s208
        $region28: #{tpu_custom_call.1} parent=19 // pred_fallthru
          _
      $region20: #{tpu_custom_call.1} parent=5 // pred_fallthru
        _
      %p210 = scmp.le.s32.totalorder 1, %s16
      %p211 = scmp.lt.s32.totalorder %s16, 4
      %p212 = pnand %p210, %p211
      %p213 = pneg %p212
      // Predicated region
      $region29: #{tpu_custom_call.1} parent=5 // pred_check
        _
      $region30: #{tpu_custom_call.1} parent=5 // pred_check_branch
        %215 = sbr.rel (%p212) target = $region32
      $region31: #{tpu_custom_call.1} parent=5 // pred_region
        %s216 = ssub.s32 %s16, 1
        // Predicated region
        $region33: #{tpu_custom_call.1} parent=31 // pred_check
          %p217 = pneg %p63
        $region34: #{tpu_custom_call.1} parent=31 // pred_check_branch
          %219 = sbr.rel (%p217) target = $region36
        $region35: #{tpu_custom_call.1} parent=31 // pred_region
          %220 = dma.done [#allocation4], 256
        $region36: #{tpu_custom_call.1} parent=31 // pred_fallthru
          _
        %s221 = sand.u32 %s78, 1
        %s222 = scalar_lea.sflag [#allocation7], %s221
        %s223 = sand.u32 %s78, 1
        %s224 = smul.addr %s223, 128
        %s225 = scalar_lea.vmem [#allocation6], %s224
        // Predicated region
        $region37: #{tpu_custom_call.1} parent=31 // pred_check
          %p226 = pneg %p91
        $region38: #{tpu_custom_call.1} parent=31 // pred_check_branch
          %228 = sbr.rel (%p226) target = $region40
        $region39: #{tpu_custom_call.1} parent=31 // pred_region
          %229 = dma.done %s222, 2048
        $region40: #{tpu_custom_call.1} parent=31 // pred_fallthru
          _
        %p230 = pneg %p63
        %p231 = pneg %p60
        %s232 = sand.u32 %s78, 1
        %s233 = scalar_lea.sflag [#allocation7], %s232
        %s234 = sand.u32 %s78, 1
        %s235 = smul.addr %s234, 128
        %s236 = scalar_lea.vmem [#allocation6], %s235
        %p237 = pneg %p91
        %p238 = pneg %p88
        %p239 = scmp.lt.s32.totalorder %s27, 2
        %s240 = scalar_select %p239, %s27, 2
        %s241 = scalar_lea.vmem %s2, %s240
        %p242 = pneg %p117
        %p243 = pneg %p114
        %p244 = pneg %p145
        %p245 = pneg %p142
        %s246 = sand.u32 %s132, 1
        %s247 = scalar_lea.sflag [#allocation5], %s246
        %s248 = sand.u32 %s132, 1
        %s249 = smul.addr %s248, 16
        %s250 = scalar_lea.vmem [#allocation8], %s249
        %s251 = smul.u32 2, %s26
        %s252 = smul.u32 16, %s28
        %p253 = scmp.lt.s32.totalorder %s27, 2
        %s254 = scalar_select %p253, %s27, 2
        %s255 = scalar_lea.vmem %s2, %s254
        %s256 = smul.u32 2, %s26
        %p257 = scmp.eq.s32.totalorder %s28, 0
        // Predicated region
        $region41: #{tpu_custom_call.1} parent=31 // pred_check
          %p258 = pneg %p257
        $region42: #{tpu_custom_call.1} parent=31 // pred_check_branch
          %260 = sbr.rel (%p258) target = $region44
        $region43: #{tpu_custom_call.1} parent=31 // pred_region
          %261 = vst [vmem:[#allocation2] sm:$0xff] 0.0
          %262 = vst [vmem:[#allocation2 + $0x8] sm:$0xff] 0.0
        $region44: #{tpu_custom_call.1} parent=31 // pred_fallthru
          _
        %v263 = vld [vmem:[#allocation2] sm:$0xff]
        %v264 = vld [vmem:[#allocation2 + $0x8] sm:$0xff]
        %v265 = vld [vmem:[#allocation3] sm:$0xff]
        %v266 = vld [vmem:[#allocation3 + $0x8] sm:$0xff]
        %v267 = vld [vmem:[%s225] sm:$0xff]
        %v268 = vld [vmem:[%s225 + $0x8] sm:$0xff]
        %v269 = vld [vmem:[%s225 + $0x10] sm:$0xff]
        %v270 = vld [vmem:[%s225 + $0x18] sm:$0xff]
        %v271 = vld [vmem:[%s225 + $0x20] sm:$0xff]
        %v272 = vld [vmem:[%s225 + $0x28] sm:$0xff]
        %v273 = vld [vmem:[%s225 + $0x30] sm:$0xff]
        %v274 = vld [vmem:[%s225 + $0x38] sm:$0xff]
        %v275 = vld [vmem:[%s225 + $0x40] sm:$0xff]
        %v276 = vld [vmem:[%s225 + $0x48] sm:$0xff]
        %v277 = vld [vmem:[%s225 + $0x50] sm:$0xff]
        %v278 = vld [vmem:[%s225 + $0x58] sm:$0xff]
        %v279 = vld [vmem:[%s225 + $0x60] sm:$0xff]
        %v280 = vld [vmem:[%s225 + $0x68] sm:$0xff]
        %v281 = vld [vmem:[%s225 + $0x70] sm:$0xff]
        %v282 = vld [vmem:[%s225 + $0x78] sm:$0xff]
        %283 = vmatprep.subr.mxu0 0.0
        %284 = vmatpush1.msra.mxu0 %v267
        %285 = vmatprep.subr.mxu0 0.0
        %286 = vmatpush1.msra.mxu0 %v268
        %287 = vmatprep.subr.mxu0 0.0
        %288 = vmatpush1.msra.mxu0 %v269
        %289 = vmatprep.subr.mxu0 0.0
        %290 = vmatpush1.msra.mxu0 %v270
        %291 = vmatprep.subr.mxu0 0.0
        %292 = vmatpush1.msra.mxu0 %v271
        %293 = vmatprep.subr.mxu0 0.0
        %294 = vmatpush1.msra.mxu0 %v272
        %295 = vmatprep.subr.mxu0 0.0
        %296 = vmatpush1.msra.mxu0 %v273
        %297 = vmatprep.subr.mxu0 0.0
        %298 = vmatpush1.msra.mxu0 %v274
        %299 = vmatprep.subr.mxu0 0.0
        %300 = vmatpush1.msra.mxu0 %v275
        %301 = vmatprep.subr.mxu0 0.0
        %302 = vmatpush1.msra.mxu0 %v276
        %303 = vmatprep.subr.mxu0 0.0
        %304 = vmatpush1.msra.mxu0 %v277
        %305 = vmatprep.subr.mxu0 0.0
        %306 = vmatpush1.msra.mxu0 %v278
        %307 = vmatprep.subr.mxu0 0.0
        %308 = vmatpush1.msra.mxu0 %v279
        %309 = vmatprep.subr.mxu0 0.0
        %310 = vmatpush1.msra.mxu0 %v280
        %311 = vmatprep.subr.mxu0 0.0
        %312 = vmatpush1.msra.mxu0 %v281
        %313 = vmatprep.subr.mxu0 0.0
        %314 = vmatpush1.msra.mxu0 %v282
        %315 = vmatprep.subr.mxu0 0.0
        %316 = vmatpush1.msra.mxu0 0.0
        %317 = vmatprep.subr.mxu0 0.0
        %318 = vmatpush1.msra.mxu0 0.0
        %319 = vmatprep.subr.mxu0 0.0
        %320 = vmatpush1.msra.mxu0 0.0
        %321 = vmatprep.subr.mxu0 0.0
        %322 = vmatpush1.msra.mxu0 0.0
        %323 = vmatprep.subr.mxu0 0.0
        %324 = vmatpush1.msra.mxu0 0.0
        %325 = vmatprep.subr.mxu0 0.0
        %326 = vmatpush1.msra.mxu0 0.0
        %327 = vmatprep.subr.mxu0 0.0
        %328 = vmatpush1.msra.mxu0 0.0
        %329 = vmatprep.subr.mxu0 0.0
        %330 = vmatpush1.msra.mxu0 0.0
        %331 = vmatprep.subr.mxu0 0.0
        %332 = vmatpush1.msra.mxu0 0.0
        %333 = vmatprep.subr.mxu0 0.0
        %334 = vmatpush1.msra.mxu0 0.0
        %335 = vmatprep.subr.mxu0 0.0
        %336 = vmatpush1.msra.mxu0 0.0
        %337 = vmatprep.subr.mxu0 0.0
        %338 = vmatpush1.msra.mxu0 0.0
        %339 = vmatprep.subr.mxu0 0.0
        %340 = vmatpush1.msra.mxu0 0.0
        %341 = vmatprep.subr.mxu0 0.0
        %342 = vmatpush1.msra.mxu0 0.0
        %343 = vmatprep.subr.mxu0 0.0
        %344 = vmatpush1.msra.mxu0 0.0
        %345 = vmatprep.subr.mxu0 0.0
        %346 = vmatpush1.msra.mxu0 0.0
        %347 = vmatprep.mubr.f32.mxu0 0.0
        %348 = vmatmul.mubr.f32.gmra.mrb[0].mxu0 %v265
        %v349 = vpop.f32.mrb[0].mxu0
        %v350 = vadd.f32 0.0, %v349
        %v351 = vpop.f32.mrb[0].mxu0
        %352 = vmatprep.mubr.f32.mxu0 0.0
        %353 = vmatmul.mubr.f32.gmra.mrb[0].mxu0 %v266
        %v354 = vpop.f32.mrb[0].mxu0
        %v355 = vadd.f32 0.0, %v354
        %v356 = vpop.f32.mrb[0].mxu0
        %357 = vdwg.mxu0
        %v358 = vadd.f32 %v263, %v350
        %v359 = vadd.f32 %v264, %v355
        %360 = vst [vmem:[#allocation2] sm:$0xff] %v358
        %361 = vst [vmem:[#allocation2 + $0x8] sm:$0xff] %v359
        // Predicated region
        $region45: #{tpu_custom_call.1} parent=31 // pred_check
          %p362 = pneg %p257
        $region46: #{tpu_custom_call.1} parent=31 // pred_check_branch
          %364 = sbr.rel (%p362) target = $region48
        $region47: #{tpu_custom_call.1} parent=31 // pred_region
          %v365 = vld [vmem:[#allocation2] sm:$0xff]
          %v366 = vld [vmem:[#allocation2 + $0x8] sm:$0xff]
          %v367 = vld [vmem:[%s255] sm:$0x1]
          %v369 = vlaneseq
          %v370 = vshrl.u32 %v369, 7
          %v371 = vsub.s32 0, %v370
          %v372 = vrot.slane %v367, %v371
          %v374 = vadd.f32 %v365, %v372
          %v375 = vadd.f32 %v366, %v372
          %376 = vst [vmem:[%s250] sm:$0xff] %v374
          %377 = vst [vmem:[%s250 + $0x8] sm:$0xff] %v375
        $region48: #{tpu_custom_call.1} parent=31 // pred_fallthru
          _
        %s378 = sand.u32 %s132, 1
        %s379 = scalar_lea.sflag [#allocation5], %s378
        %s380 = sand.u32 %s132, 1
        %s381 = smul.addr %s380, 16
        %s382 = scalar_lea.vmem [#allocation8], %s381
        // Predicated region
        $region49: #{tpu_custom_call.1} parent=31 // pred_check
          %p383 = pneg %p142
        $region50: #{tpu_custom_call.1} parent=31 // pred_check_branch
          %385 = sbr.rel (%p383) target = $region52
        $region51: #{tpu_custom_call.1} parent=31 // pred_region
          %s386 = smul.u32 2, %s26
          %s388 = ssub.s32 256, 256
          %389 = vsyncadd %s379, %s388
          %s390 = smul.addr %s386, 3
          %s391 = sadd.s32 %s27, %s390
          %s392 = smul.addr %s391, 128
          %s393 = scalar_lea.hbm %s3, %s392
          %s394 = sshll.u32 %s382, 4
          %s395 = int_to_ptr.vmem [resolvable:$true] %s394
          %400 = dma.vmem_to_hbm [thread:$0]  %s395, 256, %s393, %s379, 128, 384, 8
        $region52: #{tpu_custom_call.1} parent=31 // pred_fallthru
          _
      $region32: #{tpu_custom_call.1} parent=5 // pred_fallthru
        _
      %p401 = scmp.le.s32.totalorder 2, %s16
      // Predicated region
      $region53: #{tpu_custom_call.1} parent=5 // pred_check
        %p402 = pneg %p401
      $region54: #{tpu_custom_call.1} parent=5 // pred_check_branch
        %404 = sbr.rel (%p402) target = $region56
      $region55: #{tpu_custom_call.1} parent=5 // pred_region
        %s405 = ssub.s32 %s16, 2
        // Predicated region
        $region57: #{tpu_custom_call.1} parent=55 // pred_check
          %p406 = pneg %p148
        $region58: #{tpu_custom_call.1} parent=55 // pred_check_branch
          %408 = sbr.rel (%p406) target = $region60
        $region59: #{tpu_custom_call.1} parent=55 // pred_region
          %s409 = sand.u32 %s133, 1
          %s410 = scalar_lea.sflag [#allocation5], %s409
          %s411 = sand.u32 %s133, 1
          %s412 = smul.addr %s411, 16
          %s413 = scalar_lea.vmem [#allocation8], %s412
          %414 = dma.done %s410, 256
        $region60: #{tpu_custom_call.1} parent=55 // pred_fallthru
          _
      $region56: #{tpu_custom_call.1} parent=5 // pred_fallthru
        _
    $region6: #{tpu_custom_call.1} parent=1 // loop_footer
      %s20 = sadd.s32 1, %s16
    $region7: #{tpu_custom_call.1} parent=1 // loop_footer_branch
      %15 = sbr.rel target = $region3
    $region8: #{tpu_custom_call.1} parent=1 // loop_exit
      _
    %415 = vsyncpa [#allocation4], 1
    %s416 = scalar_lea.sflag [#allocation4], 1
    %417 = vsyncpa %s416, 1
    %418 = vsyncpa [#allocation7], 1
    %s419 = scalar_lea.sflag [#allocation7], 1
    %420 = vsyncpa %s419, 1
    %421 = vsyncpa [#allocation5], 1
    %s422 = scalar_lea.sflag [#allocation5], 1
    %423 = vsyncpa %s422, 1

</llo_original>
